<compile_context>
chip_gen: v5e
topology: v5e:2x2
jax: 0.10.0
libtpu: 0.0.40
codegen_flags: <defaults>
</compile_context>

<pallas_src>
import functools
import math

import jax
import jax.numpy as jnp
from jax import lax
from jax.experimental import pallas as pl
from jax.experimental.pallas import tpu as pltpu


# ----------------------------------------------------------------------------
# Pallas kernel: whole bottleneck block for one (TM, C) row tile per grid step
# ----------------------------------------------------------------------------
def _bottleneck_kernel(x_ref, w1_ref, w2p_ref, w2c_ref, w2n_ref, w3_ref,
                       t1_ref, t2_ref, t3_ref, mprev_ref, mnext_ref, o_ref):
    x = x_ref[...]                                                     # (TM, Cip) bf16

    # conv1 (1x1; BN1 scale folded into columns) + shift + relu
    h = jnp.dot(x, w1_ref[...], preferred_element_type=jnp.float32)   # (TM, Cmp) f32
    h = jnp.maximum(h + t1_ref[...], 0.0)

    # conv2 (k=3, pad=1, stride=1) as three accumulating matmuls on row-shifted h.
    # Per-row masks (precomputed in the wrapper) zero the shifted rows at sequence
    # boundaries so the rotation never leaks across batch elements in the flat tile.
    TM = h.shape[0]
    h_prev = (pltpu.roll(h, shift=1, axis=0) * mprev_ref[...]).astype(jnp.bfloat16)
    # shift=TM-1 == shift=-1; Mosaic static rotate amounts must be non-negative.
    h_next = (pltpu.roll(h, shift=TM - 1, axis=0) * mnext_ref[...]).astype(jnp.bfloat16)
    h2 = jnp.dot(h_prev, w2p_ref[...], preferred_element_type=jnp.float32)
    h2 = h2 + jnp.dot(h.astype(jnp.bfloat16), w2c_ref[...],
                      preferred_element_type=jnp.float32)
    h2 = h2 + jnp.dot(h_next, w2n_ref[...], preferred_element_type=jnp.float32)
    h2 = jnp.maximum(h2 + t2_ref[...], 0.0)

    # conv3 (1x1; BN3 scale folded) + shift
    h3 = jnp.dot(h2.astype(jnp.bfloat16), w3_ref[...],
                 preferred_element_type=jnp.float32)                   # (TM, Cop) f32
    h3 = h3 + t3_ref[...]

    # residual add (downsample is None -> identity = x, Cout == Cin) + relu -> bf16 out
    o_ref[...] = jnp.maximum(h3 + x.astype(jnp.float32), 0.0).astype(o_ref.dtype)


# ----------------------------------------------------------------------------
# Wrapper: layout/padding, BN folding, per-generation tiling, pallas_call plumbing
# ----------------------------------------------------------------------------
def _pad_to(n, m):
    return ((n + m - 1) // m) * m


def _tpu_vmem_capacity_bytes():
    try:
        return int(pltpu.get_tpu_info().vmem_capacity_bytes)
    except Exception:
        return 64 * 1024 * 1024            # conservative fallback (v7x per-core VMEM)


@functools.partial(jax.jit, static_argnames=("target_rows",))
def bottleneck_block(x_ncl, params, *, target_rows=None):
    """x_ncl: (B, Cin, L) PyTorch NCL layout.  Returns (B, Cin, L) in bfloat16."""
    B, Cin, L = x_ncl.shape
    w1 = jnp.transpose(params["w1"][:, :, 0], (1, 0))                  # (Cin,  Cmid)
    w3 = jnp.transpose(params["w3"][:, :, 0], (1, 0))                  # (Cmid, Cout)
    Cmid, Cout = w1.shape[1], w3.shape[1]
    assert Cout == Cin, "identity residual requires in_channels == out_channels*expansion"
    # TODO(synk): stride>1 / non-None downsample branch not implemented (defaults used).

    # lane-dense channel padding (multiples of 128); padded lanes stay exactly zero
    Cip = _pad_to(Cin, 128)
    Cmp = _pad_to(Cmid, 128)
    Cop = _pad_to(Cout, 128)                                           # == Cip

    # ---- per-generation VMEM budget & row-tile sizing ----
    vmem_phys = _tpu_vmem_capacity_bytes()
    vmem_limit = min((vmem_phys * 5) // 8, 64 * 1024 * 1024)           # ~40MiB v7x, 64MiB v5e/v6e
    if target_rows is None:
        target_rows = 1024 if vmem_phys > 96 * 1024 * 1024 else 512

    step = 16 // math.gcd(L, 16)                    # TM multiple of 16 (bf16 sublane packing)
    Bt = max(1, target_rows // max(L, 1))           # whole sequences per row tile
    Bt = min(Bt, B)
    Bt = max(step, (Bt // step) * step)
    if B >= 2 * step:                               # keep >= 2 row tiles (v7x has 2 TCs)
        Bt = min(Bt, (((B + 1) // 2) + step - 1) // step * step)

    def _tile_vmem_bytes(bt):
        tm = bt * L
        act = 2 * tm * Cip * 2                                    # x bf16, double-buffered
        out = 2 * tm * Cop * 2                                    # out bf16, double-buffered
        wts = (Cip * Cmp + 3 * Cmp * Cmp + Cmp * Cop) * 2         # single-buffered weights
        vec = (2 * Cmp + Cop) * 4 + 2 * tm * 4                    # shifts + masks
        tmp = tm * (2 * Cmp + Cop) * 4 + 3 * tm * Cmp * 2         # f32 h/h2/h3 + bf16 shifted
        return act + out + wts + vec + tmp

    while Bt > step and _tile_vmem_bytes(Bt) > int(0.7 * vmem_limit):
        Bt -= step
    # TODO(synk): if even a single-sequence tile overflows VMEM (very long L with wide
    #             channels), add intra-sequence row tiling with a 1-row conv2 halo.
    assert _tile_vmem_bytes(Bt) <= vmem_limit, "row tile too large; needs intra-sequence tiling"

    Bp = ((B + Bt - 1) // Bt) * Bt
    TM = Bt * L
    Mp = Bp * L

    # ---- activations: cast bf16 FIRST (halves transpose traffic), then NCL -> rows ----
    # TODO(synk): in a full model keep activations in (B, L, C) bf16 across blocks so
    #             both wrapper transposes disappear entirely.
    xf = jnp.transpose(x_ncl.astype(jnp.bfloat16), (0, 2, 1))          # (B, L, Cin) bf16
    xf = jnp.pad(xf, ((0, Bp - B), (0, 0), (0, Cip - Cin)))
    xf = xf.reshape(Mp, Cip)

    # ---- eval-mode BN folding: scale -> weight columns (f32), shift stays in kernel ----
    def fold(gamma, beta, mean, var, eps=1e-5):
        scale = gamma / jnp.sqrt(var + eps)
        shift = beta - mean * scale
        return scale.astype(jnp.float32), shift.astype(jnp.float32)

    s1, t1 = fold(params["bn1_g"], params["bn1_b"], params["bn1_m"], params["bn1_v"])
    s2, t2 = fold(params["bn2_g"], params["bn2_b"], params["bn2_m"], params["bn2_v"])
    s3, t3 = fold(params["bn3_g"], params["bn3_b"], params["bn3_m"], params["bn3_v"])

    def pad2(w, r, c):
        return jnp.pad(w, ((0, r - w.shape[0]), (0, c - w.shape[1]))).astype(jnp.bfloat16)

    def pad_row(v, c):
        return jnp.pad(v, (0, c - v.shape[0]))[None, :].astype(jnp.float32)

    w1p = pad2(w1 * s1[None, :], Cip, Cmp)                              # (Cip, Cmp)
    w2t = [pad2(jnp.transpose(params["w2"][:, :, k], (1, 0)) * s2[None, :], Cmp, Cmp)
           for k in range(3)]                                           # taps: prev/center/next
    w3p = pad2(w3 * s3[None, :], Cmp, Cop)                              # (Cmp, Cop)
    t1p, t2p, t3p = pad_row(t1, Cmp), pad_row(t2, Cmp), pad_row(t3, Cop)

    # conv2 boundary masks (identical for every tile: each tile holds whole sequences)
    l_idx = jnp.arange(TM, dtype=jnp.int32) % L
    mprev = (l_idx > 0).astype(jnp.float32)[:, None]                    # (TM, 1)
    mnext = (l_idx < L - 1).astype(jnp.float32)[:, None]                # (TM, 1)

    def const_spec(a):                      # grid-invariant operand -> single-buffered
        return pl.BlockSpec(a.shape, lambda i: (0,) * a.ndim, pipeline_mode=pl.Buffered(1))

    flops = 2 * Mp * (Cip * Cmp + 3 * Cmp * Cmp + Cmp * Cop)
    bytes_accessed = ((xf.size + Mp * Cop) * 2
                      + (w1p.size + 3 * w2t[0].size + w3p.size) * 2
                      + (t1p.size + t2p.size + t3p.size + mprev.size + mnext.size) * 4)

    out = pl.pallas_call(
        _bottleneck_kernel,
        out_shape=jax.ShapeDtypeStruct((Mp, Cop), jnp.bfloat16),        # bf16 output
        grid_spec=pl.GridSpec(
            grid=(Mp // TM,),
            in_specs=[
                pl.BlockSpec((TM, Cip), lambda i: (i, 0)),              # x rows
                const_spec(w1p), const_spec(w2t[0]), const_spec(w2t[1]),
                const_spec(w2t[2]), const_spec(w3p),
                const_spec(t1p), const_spec(t2p), const_spec(t3p),
                const_spec(mprev), const_spec(mnext),
            ],
            out_specs=pl.BlockSpec((TM, Cop), lambda i: (i, 0)),
        ),
        compiler_params=pltpu.CompilerParams(
            dimension_semantics=("parallel",),
            vmem_limit_bytes=int(vmem_limit),
        ),
        cost_estimate=pl.CostEstimate(flops=flops, transcendentals=0,
                                      bytes_accessed=bytes_accessed),
    )(xf, w1p, w2t[0], w2t[1], w2t[2], w3p, t1p, t2p, t3p, mprev, mnext)

    out = out[: B * L].reshape(B, L, Cop)[:, :, :Cout]                  # drop padding (bf16)
    return jnp.transpose(out, (0, 2, 1))                                # back to (B, Cout, L)


# ----------------------------------------------------------------------------
# Pure-JAX reference (mirrors the PyTorch forward, BN in eval mode, f32)
# ----------------------------------------------------------------------------
def _conv1d(x, w, padding=0):
    return lax.conv_general_dilated(
        x, w, window_strides=(1,), padding=[(padding, padding)],
        dimension_numbers=("NCH", "OIH", "NCH"))


def _bn_eval(x, g, b, m, v, eps=1e-5):
    return (x - m[None, :, None]) / jnp.sqrt(v[None, :, None] + eps) * g[None, :, None] + b[None, :, None]


def bottleneck_block_ref(x, p):
    out = jnp.maximum(_bn_eval(_conv1d(x, p["w1"]), p["bn1_g"], p["bn1_b"], p["bn1_m"], p["bn1_v"]), 0.0)
    out = jnp.maximum(_bn_eval(_conv1d(out, p["w2"], padding=1), p["bn2_g"], p["bn2_b"], p["bn2_m"], p["bn2_v"]), 0.0)
    out = _bn_eval(_conv1d(out, p["w3"]), p["bn3_g"], p["bn3_b"], p["bn3_m"], p["bn3_v"])
    return jnp.maximum(out + x, 0.0)


# ----------------------------------------------------------------------------
# Deterministic parameter construction + demo
# ----------------------------------------------------------------------------
def make_params(key, in_channels, out_channels, expansion=4):
    ks = jax.random.split(key, 6)
    cm, co = out_channels, out_channels * expansion

    def bn(k, n):
        kg, kb, km, kv = jax.random.split(k, 4)
        return (jax.random.uniform(kg, (n,), jnp.float32, 0.5, 1.5),   # gamma
                jax.random.normal(kb, (n,), jnp.float32) * 0.1,        # beta
                jax.random.normal(km, (n,), jnp.float32) * 0.05,       # running_mean
                jax.random.uniform(kv, (n,), jnp.float32, 0.5, 1.5))   # running_var

    p = {
        "w1": jax.random.normal(ks[0], (cm, in_channels, 1), jnp.float32) * 0.2,
        "w2": jax.random.normal(ks[1], (cm, cm, 3), jnp.float32) * 0.2,
        "w3": jax.random.normal(ks[2], (co, cm, 1), jnp.float32) * 0.2,
    }
    p["bn1_g"], p["bn1_b"], p["bn1_m"], p["bn1_v"] = bn(ks[3], cm)
    p["bn2_g"], p["bn2_b"], p["bn2_m"], p["bn2_v"] = bn(ks[4], cm)
    p["bn3_g"], p["bn3_b"], p["bn3_m"], p["bn3_v"] = bn(ks[5], co)
    return p


if __name__ == "__main__":
    key = jax.random.PRNGKey(0)
    kx, kp = jax.random.split(key)

    B, out_channels, L = 2, 4, 16
    in_channels = out_channels * 4        # = 16, so the identity residual is valid
    x = jax.random.normal(kx, (B, in_channels, L), jnp.float32)
    params = make_params(kp, in_channels, out_channels)

    y = bottleneck_block(x, params)
    jax.block_until_ready(y)

    y_ref = bottleneck_block_ref(x, params)
    assert y.shape == (B, in_channels, L)

    # bf16 matmul operands + bf16 output (f32 accumulate / f32 epilogue): bf16 tolerance
    yf = y.astype(jnp.float32)
    max_abs = float(jnp.max(jnp.abs(yf - y_ref)))
    rel_l2 = float(jnp.linalg.norm(yf - y_ref) / (jnp.linalg.norm(y_ref) + 1e-12))
    assert jnp.allclose(yf, y_ref, rtol=5e-2, atol=5e-2), (max_abs, rel_l2)
    assert rel_l2 < 3e-2, rel_l2

    print("KERNEL_OK")
</pallas_src>

<mosaic_0001>
module attributes {stable_mosaic.version = 11 : i64} {
  func.func @_bottleneck_kernel(%arg0: i32, %arg1: memref<16x128xbf16, #tpu.memory_space<vmem>>, %arg2: memref<128x128xbf16, #tpu.memory_space<vmem>>, %arg3: memref<128x128xbf16, #tpu.memory_space<vmem>>, %arg4: memref<128x128xbf16, #tpu.memory_space<vmem>>, %arg5: memref<128x128xbf16, #tpu.memory_space<vmem>>, %arg6: memref<128x128xbf16, #tpu.memory_space<vmem>>, %arg7: memref<1x128xf32, #tpu.memory_space<vmem>>, %arg8: memref<1x128xf32, #tpu.memory_space<vmem>>, %arg9: memref<1x128xf32, #tpu.memory_space<vmem>>, %arg10: memref<16x1xf32, #tpu.memory_space<vmem>>, %arg11: memref<16x1xf32, #tpu.memory_space<vmem>>, %arg12: memref<16x128xbf16, #tpu.memory_space<vmem>>) attributes {dimension_semantics = [#tpu.dimension_semantics<parallel>], iteration_bounds = array<i64: 2>, scalar_prefetch = 0 : i64, scratch_operands = 0 : i64, tpu.core_type = #tpu.core_type<tc>, window_params = [{transform_indices = @transform_0, window_bounds = array<i64: 16, 128>}, {pipeline_mode = #tpu.pipeline_mode<synchronous>, transform_indices = @transform_1, window_bounds = array<i64: 128, 128>}, {pipeline_mode = #tpu.pipeline_mode<synchronous>, transform_indices = @transform_2, window_bounds = array<i64: 128, 128>}, {pipeline_mode = #tpu.pipeline_mode<synchronous>, transform_indices = @transform_3, window_bounds = array<i64: 128, 128>}, {pipeline_mode = #tpu.pipeline_mode<synchronous>, transform_indices = @transform_4, window_bounds = array<i64: 128, 128>}, {pipeline_mode = #tpu.pipeline_mode<synchronous>, transform_indices = @transform_5, window_bounds = array<i64: 128, 128>}, {pipeline_mode = #tpu.pipeline_mode<synchronous>, transform_indices = @transform_6, window_bounds = array<i64: 1, 128>}, {pipeline_mode = #tpu.pipeline_mode<synchronous>, transform_indices = @transform_7, window_bounds = array<i64: 1, 128>}, {pipeline_mode = #tpu.pipeline_mode<synchronous>, transform_indices = @transform_8, window_bounds = array<i64: 1, 128>}, {pipeline_mode = #tpu.pipeline_mode<synchronous>, transform_indices = @transform_9, window_bounds = array<i64: 16, 1>}, {pipeline_mode = #tpu.pipeline_mode<synchronous>, transform_indices = @transform_10, window_bounds = array<i64: 16, 1>}, {transform_indices = @transform_11, window_bounds = array<i64: 16, 128>}]} {
    %c0 = arith.constant 0 : index
    %c0_0 = arith.constant 0 : index
    %0 = vector.load %arg1[%c0, %c0_0] : memref<16x128xbf16, #tpu.memory_space<vmem>>, vector<16x128xbf16>
    %c0_1 = arith.constant 0 : index
    %c0_2 = arith.constant 0 : index
    %1 = vector.load %arg2[%c0_1, %c0_2] : memref<128x128xbf16, #tpu.memory_space<vmem>>, vector<128x128xbf16>
    %cst = arith.constant dense<0.000000e+00> : vector<16x128xf32>
    %2 = tpu.matmul %0, %1, %cst {dimension_numbers = #tpu.dot_dimension_numbers<[1], [0], [0], [1], [0, 0, 1, 1], [], []>} : vector<16x128xbf16>, vector<128x128xbf16>, vector<16x128xf32> -> vector<16x128xf32>
    %c0_3 = arith.constant 0 : index
    %c0_4 = arith.constant 0 : index
    %3 = vector.load %arg7[%c0_3, %c0_4] : memref<1x128xf32, #tpu.memory_space<vmem>>, vector<1x128xf32>
    %4 = vector.broadcast %3 : vector<1x128xf32> to vector<16x128xf32>
    %5 = arith.addf %2, %4 : vector<16x128xf32>
    %cst_5 = arith.constant 0.000000e+00 : f32
    %6 = vector.broadcast %cst_5 : f32 to vector<16x128xf32>
    %7 = arith.maximumf %5, %6 : vector<16x128xf32>
    %c1_i32 = arith.constant 1 : i32
    %8 = tpu.dynamic_rotate %7 by %c1_i32 dim 0 : vector<16x128xf32>, i32 -> vector<16x128xf32>
    %c0_6 = arith.constant 0 : index
    %c0_7 = arith.constant 0 : index
    %9 = vector.load %arg10[%c0_6, %c0_7] : memref<16x1xf32, #tpu.memory_space<vmem>>, vector<16x1xf32>
    %10 = vector.broadcast %9 : vector<16x1xf32> to vector<16x128xf32>
    %11 = arith.mulf %8, %10 : vector<16x128xf32>
    %12 = arith.truncf %11 : vector<16x128xf32> to vector<16x128xbf16>
    %c15_i32 = arith.constant 15 : i32
    %13 = tpu.dynamic_rotate %7 by %c15_i32 dim 0 : vector<16x128xf32>, i32 -> vector<16x128xf32>
    %c0_8 = arith.constant 0 : index
    %c0_9 = arith.constant 0 : index
    %14 = vector.load %arg11[%c0_8, %c0_9] : memref<16x1xf32, #tpu.memory_space<vmem>>, vector<16x1xf32>
    %15 = vector.broadcast %14 : vector<16x1xf32> to vector<16x128xf32>
    %16 = arith.mulf %13, %15 : vector<16x128xf32>
    %17 = arith.truncf %16 : vector<16x128xf32> to vector<16x128xbf16>
    %c0_10 = arith.constant 0 : index
    %c0_11 = arith.constant 0 : index
    %18 = vector.load %arg3[%c0_10, %c0_11] : memref<128x128xbf16, #tpu.memory_space<vmem>>, vector<128x128xbf16>
    %cst_12 = arith.constant dense<0.000000e+00> : vector<16x128xf32>
    %19 = tpu.matmul %12, %18, %cst_12 {dimension_numbers = #tpu.dot_dimension_numbers<[1], [0], [0], [1], [0, 0, 1, 1], [], []>} : vector<16x128xbf16>, vector<128x128xbf16>, vector<16x128xf32> -> vector<16x128xf32>
    %20 = arith.truncf %7 : vector<16x128xf32> to vector<16x128xbf16>
    %c0_13 = arith.constant 0 : index
    %c0_14 = arith.constant 0 : index
    %21 = vector.load %arg4[%c0_13, %c0_14] : memref<128x128xbf16, #tpu.memory_space<vmem>>, vector<128x128xbf16>
    %cst_15 = arith.constant dense<0.000000e+00> : vector<16x128xf32>
    %22 = tpu.matmul %20, %21, %cst_15 {dimension_numbers = #tpu.dot_dimension_numbers<[1], [0], [0], [1], [0, 0, 1, 1], [], []>} : vector<16x128xbf16>, vector<128x128xbf16>, vector<16x128xf32> -> vector<16x128xf32>
    %23 = arith.addf %19, %22 : vector<16x128xf32>
    %c0_16 = arith.constant 0 : index
    %c0_17 = arith.constant 0 : index
    %24 = vector.load %arg5[%c0_16, %c0_17] : memref<128x128xbf16, #tpu.memory_space<vmem>>, vector<128x128xbf16>
    %cst_18 = arith.constant dense<0.000000e+00> : vector<16x128xf32>
    %25 = tpu.matmul %17, %24, %cst_18 {dimension_numbers = #tpu.dot_dimension_numbers<[1], [0], [0], [1], [0, 0, 1, 1], [], []>} : vector<16x128xbf16>, vector<128x128xbf16>, vector<16x128xf32> -> vector<16x128xf32>
    %26 = arith.addf %23, %25 : vector<16x128xf32>
    %c0_19 = arith.constant 0 : index
    %c0_20 = arith.constant 0 : index
    %27 = vector.load %arg8[%c0_19, %c0_20] : memref<1x128xf32, #tpu.memory_space<vmem>>, vector<1x128xf32>
    %28 = vector.broadcast %27 : vector<1x128xf32> to vector<16x128xf32>
    %29 = arith.addf %26, %28 : vector<16x128xf32>
    %cst_21 = arith.constant 0.000000e+00 : f32
    %30 = vector.broadcast %cst_21 : f32 to vector<16x128xf32>
    %31 = arith.maximumf %29, %30 : vector<16x128xf32>
    %32 = arith.truncf %31 : vector<16x128xf32> to vector<16x128xbf16>
    %c0_22 = arith.constant 0 : index
    %c0_23 = arith.constant 0 : index
    %33 = vector.load %arg6[%c0_22, %c0_23] : memref<128x128xbf16, #tpu.memory_space<vmem>>, vector<128x128xbf16>
    %cst_24 = arith.constant dense<0.000000e+00> : vector<16x128xf32>
    %34 = tpu.matmul %32, %33, %cst_24 {dimension_numbers = #tpu.dot_dimension_numbers<[1], [0], [0], [1], [0, 0, 1, 1], [], []>} : vector<16x128xbf16>, vector<128x128xbf16>, vector<16x128xf32> -> vector<16x128xf32>
    %c0_25 = arith.constant 0 : index
    %c0_26 = arith.constant 0 : index
    %35 = vector.load %arg9[%c0_25, %c0_26] : memref<1x128xf32, #tpu.memory_space<vmem>>, vector<1x128xf32>
    %36 = vector.broadcast %35 : vector<1x128xf32> to vector<16x128xf32>
    %37 = arith.addf %34, %36 : vector<16x128xf32>
    %38 = arith.extf %0 : vector<16x128xbf16> to vector<16x128xf32>
    %39 = arith.addf %37, %38 : vector<16x128xf32>
    %cst_27 = arith.constant 0.000000e+00 : f32
    %40 = vector.broadcast %cst_27 : f32 to vector<16x128xf32>
    %41 = arith.maximumf %39, %40 : vector<16x128xf32>
    %42 = arith.truncf %41 : vector<16x128xf32> to vector<16x128xbf16>
    %c0_28 = arith.constant 0 : index
    %c0_29 = arith.constant 0 : index
    %43 = vector.load %arg12[%c0_28, %c0_29] : memref<16x128xbf16, #tpu.memory_space<vmem>>, vector<16x128xbf16>
    tpu.vector_store %arg12[%c0_28, %c0_29], %42 {strides = array<i32>} : memref<16x128xbf16, #tpu.memory_space<vmem>>, vector<16x128xbf16>,
    return
  }
  func.func @transform_0(%arg0: i32) -> (i32, i32) {
    %c0_i32 = arith.constant 0 : i32
    %c0_i32_0 = arith.constant 0 : i32
    return %arg0, %c0_i32 : i32, i32
  }
  func.func @transform_1(%arg0: i32) -> (i32, i32) {
    %c0_i32 = arith.constant 0 : i32
    %c0_i32_0 = arith.constant 0 : i32
    %c0_i32_1 = arith.constant 0 : i32
    return %c0_i32, %c0_i32_0 : i32, i32
  }
  func.func @transform_2(%arg0: i32) -> (i32, i32) {
    %c0_i32 = arith.constant 0 : i32
    %c0_i32_0 = arith.constant 0 : i32
    %c0_i32_1 = arith.constant 0 : i32
    return %c0_i32, %c0_i32_0 : i32, i32
  }
  func.func @transform_3(%arg0: i32) -> (i32, i32) {
    %c0_i32 = arith.constant 0 : i32
    %c0_i32_0 = arith.constant 0 : i32
    %c0_i32_1 = arith.constant 0 : i32
    return %c0_i32, %c0_i32_0 : i32, i32
  }
  func.func @transform_4(%arg0: i32) -> (i32, i32) {
    %c0_i32 = arith.constant 0 : i32
    %c0_i32_0 = arith.constant 0 : i32
    %c0_i32_1 = arith.constant 0 : i32
    return %c0_i32, %c0_i32_0 : i32, i32
  }
  func.func @transform_5(%arg0: i32) -> (i32, i32) {
    %c0_i32 = arith.constant 0 : i32
    %c0_i32_0 = arith.constant 0 : i32
    %c0_i32_1 = arith.constant 0 : i32
    return %c0_i32, %c0_i32_0 : i32, i32
  }
  func.func @transform_6(%arg0: i32) -> (i32, i32) {
    %c0_i32 = arith.constant 0 : i32
    %c0_i32_0 = arith.constant 0 : i32
    %c0_i32_1 = arith.constant 0 : i32
    return %c0_i32, %c0_i32_0 : i32, i32
  }
  func.func @transform_7(%arg0: i32) -> (i32, i32) {
    %c0_i32 = arith.constant 0 : i32
    %c0_i32_0 = arith.constant 0 : i32
    %c0_i32_1 = arith.constant 0 : i32
    return %c0_i32, %c0_i32_0 : i32, i32
  }
  func.func @transform_8(%arg0: i32) -> (i32, i32) {
    %c0_i32 = arith.constant 0 : i32
    %c0_i32_0 = arith.constant 0 : i32
    %c0_i32_1 = arith.constant 0 : i32
    return %c0_i32, %c0_i32_0 : i32, i32
  }
  func.func @transform_9(%arg0: i32) -> (i32, i32) {
    %c0_i32 = arith.constant 0 : i32
    %c0_i32_0 = arith.constant 0 : i32
    %c0_i32_1 = arith.constant 0 : i32
    return %c0_i32, %c0_i32_0 : i32, i32
  }
  func.func @transform_10(%arg0: i32) -> (i32, i32) {
    %c0_i32 = arith.constant 0 : i32
    %c0_i32_0 = arith.constant 0 : i32
    %c0_i32_1 = arith.constant 0 : i32
    return %c0_i32, %c0_i32_0 : i32, i32
  }
  func.func @transform_11(%arg0: i32) -> (i32, i32) {
    %c0_i32 = arith.constant 0 : i32
    %c0_i32_0 = arith.constant 0 : i32
    return %arg0, %c0_i32 : i32, i32
  }
}

</mosaic_0001>

<llo_original>
// kernel: bottleneck_block.1
$region0: #{bottleneck_block.1}
  #allocation0 [shape = 'u32[]', space=smem, size = 0x4, offset = 0x4, fixed_abs, tag = 'smem constant byte address 0x4 - core index']
  #allocation1 [shape = 'u32[72,128]{1,0:T(1,128)}', space=vmem, size = 0x9000, scoped, tag = 'internal scratch']
  %s0 = inlined_call_operand.vmem [shape: bf16[32,128], index: 0, kind: input, shape index: {}]
  %s1 = inlined_call_operand.vmem [shape: bf16[128,128], index: 1, kind: input, shape index: {}]
  %s2 = inlined_call_operand.vmem [shape: bf16[128,128], index: 2, kind: input, shape index: {}]
  %s3 = inlined_call_operand.vmem [shape: bf16[128,128], index: 3, kind: input, shape index: {}]
  %s4 = inlined_call_operand.vmem [shape: bf16[128,128], index: 4, kind: input, shape index: {}]
  %s5 = inlined_call_operand.vmem [shape: bf16[128,128], index: 5, kind: input, shape index: {}]
  %s6 = inlined_call_operand.vmem [shape: f32[1,128], index: 6, kind: input, shape index: {}]
  %s7 = inlined_call_operand.vmem [shape: f32[1,128], index: 7, kind: input, shape index: {}]
  %s8 = inlined_call_operand.vmem [shape: f32[1,128], index: 8, kind: input, shape index: {}]
  %s9 = inlined_call_operand.vmem [shape: f32[16,1], index: 9, kind: input, shape index: {}]
  %s10 = inlined_call_operand.vmem [shape: f32[16,1], index: 10, kind: input, shape index: {}]
  %s11 = inlined_call_operand.vmem [shape: bf16[32,128], index: 11, kind: output, shape index: {}]
  %s12 = sld [smem:[#allocation0]]
  $region77: #{bottleneck_block.1} parent=0
    _
  %s14 = ssub.s32 1, %s12
  %s15 = scalar_select 0, %s14, %s12
  loop: start=0, step=1, limit=4
  $region2: #{bottleneck_block.1} parent=0 // loop_pre_header
    _
  $region3: #{bottleneck_block.1} parent=0 // loop_header
    %s17 = sphi 0, %s21
    %p18 = scmp.ge.s32.totalorder %s17, 4
    %s27 = sphi 0, %s29
    %s30 = sphi 0, %s27
    %s31 = sphi 0, %s30
    %s47 = sphi 0, %s31
    %s51 = sphi 0, %s51
    %s53 = sphi 0, %s51
    %s54 = sphi 0, %s53
    %s68 = sphi 0, %s54
    %s72 = sphi 0, %s72
    %s74 = sphi 0, %s72
    %s75 = sphi 0, %s74
    %s89 = sphi 0, %s75
    %s93 = sphi 0, %s93
    %s95 = sphi 0, %s93
    %s96 = sphi 0, %s95
    %s110 = sphi 0, %s96
    %s114 = sphi 0, %s114
    %s116 = sphi 0, %s114
    %s117 = sphi 0, %s116
    %s131 = sphi 0, %s117
    %s135 = sphi 0, %s135
    %s137 = sphi 0, %s135
    %s138 = sphi 0, %s137
    %s152 = sphi 0, %s138
    %s156 = sphi 0, %s156
    %s158 = sphi 0, %s156
    %s159 = sphi 0, %s158
    %s173 = sphi 0, %s159
    %s177 = sphi 0, %s177
    %s179 = sphi 0, %s177
    %s180 = sphi 0, %s179
    %s194 = sphi 0, %s180
    %s198 = sphi 0, %s198
    %s200 = sphi 0, %s198
    %s201 = sphi 0, %s200
    %s215 = sphi 0, %s201
    %s219 = sphi 0, %s219
    %s221 = sphi 0, %s219
    %s222 = sphi 0, %s221
    %s236 = sphi 0, %s222
    %s240 = sphi 0, %s240
    %s242 = sphi 0, %s240
    %s243 = sphi 0, %s242
    %s257 = sphi 0, %s243
    %s263 = sphi 0, %s265
    %s266 = sphi 0, %s263
    %s267 = sphi 0, %s266
    %s283 = sphi 0, %s267
  $region4: #{bottleneck_block.1} parent=0 // loop_header_branch
    %20 = sbr.rel (%p18) target = $region8
  $region5: #{bottleneck_block.1} parent=0 // loop_body
    %s22 = ssub.s32 %s17, 1
    %s23 = ssub.s32 %s17, 2
    %s24 = sadd.s32 %s17, 1
    %s25 = ssub.s32 %s17, %s24
    %p26 = scmp.eq.s32.totalorder %s25, 0
    %s28 = sadd.s32 %s27, 1
    %s29 = scalar_select %p26, %s27, %s28
    %p32 = pneg %p26
    %p33 = scmp.eq.s32.totalorder %s17, 1
    %p34 = por %p32, %p33
    %p35 = scmp.ne.s32.totalorder %s27, %s30
    %p36 = scmp.eq.s32.totalorder %s17, 0
    %p37 = por %p35, %p36
    %p38 = scmp.ne.s32.totalorder %s27, %s30
    %p39 = scmp.eq.s32.totalorder %s22, 1
    %p40 = por %p38, %p39
    %p41 = scmp.ne.s32.totalorder %s30, %s31
    %p42 = scmp.eq.s32.totalorder %s22, 0
    %p43 = por %p41, %p42
    %p44 = scmp.ne.s32.totalorder %s30, %s31
    %p45 = scmp.eq.s32.totalorder %s23, 1
    %p46 = por %p44, %p45
    %p48 = scmp.ne.s32.totalorder %s31, %s47
    %p49 = scmp.eq.s32.totalorder %s23, 0
    %p50 = por %p48, %p49
    %s52 = sadd.s32 %s51, 1
    %p55 = scmp.eq.s32.totalorder %s17, 1
    %p56 = scmp.ne.s32.totalorder %s51, %s53
    %p57 = scmp.eq.s32.totalorder %s17, 0
    %p58 = por %p56, %p57
    %p59 = scmp.ne.s32.totalorder %s51, %s53
    %p60 = scmp.eq.s32.totalorder %s22, 1
    %p61 = por %p59, %p60
    %p62 = scmp.ne.s32.totalorder %s53, %s54
    %p63 = scmp.eq.s32.totalorder %s22, 0
    %p64 = por %p62, %p63
    %p65 = scmp.ne.s32.totalorder %s53, %s54
    %p66 = scmp.eq.s32.totalorder %s23, 1
    %p67 = por %p65, %p66
    %p69 = scmp.ne.s32.totalorder %s54, %s68
    %p70 = scmp.eq.s32.totalorder %s23, 0
    %p71 = por %p69, %p70
    %s73 = sadd.s32 %s72, 1
    %p76 = scmp.eq.s32.totalorder %s17, 1
    %p77 = scmp.ne.s32.totalorder %s72, %s74
    %p78 = scmp.eq.s32.totalorder %s17, 0
    %p79 = por %p77, %p78
    %p80 = scmp.ne.s32.totalorder %s72, %s74
    %p81 = scmp.eq.s32.totalorder %s22, 1
    %p82 = por %p80, %p81
    %p83 = scmp.ne.s32.totalorder %s74, %s75
    %p84 = scmp.eq.s32.totalorder %s22, 0
    %p85 = por %p83, %p84
    %p86 = scmp.ne.s32.totalorder %s74, %s75
    %p87 = scmp.eq.s32.totalorder %s23, 1
    %p88 = por %p86, %p87
    %p90 = scmp.ne.s32.totalorder %s75, %s89
    %p91 = scmp.eq.s32.totalorder %s23, 0
    %p92 = por %p90, %p91
    %s94 = sadd.s32 %s93, 1
    %p97 = scmp.eq.s32.totalorder %s17, 1
    %p98 = scmp.ne.s32.totalorder %s93, %s95
    %p99 = scmp.eq.s32.totalorder %s17, 0
    %p100 = por %p98, %p99
    %p101 = scmp.ne.s32.totalorder %s93, %s95
    %p102 = scmp.eq.s32.totalorder %s22, 1
    %p103 = por %p101, %p102
    %p104 = scmp.ne.s32.totalorder %s95, %s96
    %p105 = scmp.eq.s32.totalorder %s22, 0
    %p106 = por %p104, %p105
    %p107 = scmp.ne.s32.totalorder %s95, %s96
    %p108 = scmp.eq.s32.totalorder %s23, 1
    %p109 = por %p107, %p108
    %p111 = scmp.ne.s32.totalorder %s96, %s110
    %p112 = scmp.eq.s32.totalorder %s23, 0
    %p113 = por %p111, %p112
    %s115 = sadd.s32 %s114, 1
    %p118 = scmp.eq.s32.totalorder %s17, 1
    %p119 = scmp.ne.s32.totalorder %s114, %s116
    %p120 = scmp.eq.s32.totalorder %s17, 0
    %p121 = por %p119, %p120
    %p122 = scmp.ne.s32.totalorder %s114, %s116
    %p123 = scmp.eq.s32.totalorder %s22, 1
    %p124 = por %p122, %p123
    %p125 = scmp.ne.s32.totalorder %s116, %s117
    %p126 = scmp.eq.s32.totalorder %s22, 0
    %p127 = por %p125, %p126
    %p128 = scmp.ne.s32.totalorder %s116, %s117
    %p129 = scmp.eq.s32.totalorder %s23, 1
    %p130 = por %p128, %p129
    %p132 = scmp.ne.s32.totalorder %s117, %s131
    %p133 = scmp.eq.s32.totalorder %s23, 0
    %p134 = por %p132, %p133
    %s136 = sadd.s32 %s135, 1
    %p139 = scmp.eq.s32.totalorder %s17, 1
    %p140 = scmp.ne.s32.totalorder %s135, %s137
    %p141 = scmp.eq.s32.totalorder %s17, 0
    %p142 = por %p140, %p141
    %p143 = scmp.ne.s32.totalorder %s135, %s137
    %p144 = scmp.eq.s32.totalorder %s22, 1
    %p145 = por %p143, %p144
    %p146 = scmp.ne.s32.totalorder %s137, %s138
    %p147 = scmp.eq.s32.totalorder %s22, 0
    %p148 = por %p146, %p147
    %p149 = scmp.ne.s32.totalorder %s137, %s138
    %p150 = scmp.eq.s32.totalorder %s23, 1
    %p151 = por %p149, %p150
    %p153 = scmp.ne.s32.totalorder %s138, %s152
    %p154 = scmp.eq.s32.totalorder %s23, 0
    %p155 = por %p153, %p154
    %s157 = sadd.s32 %s156, 1
    %p160 = scmp.eq.s32.totalorder %s17, 1
    %p161 = scmp.ne.s32.totalorder %s156, %s158
    %p162 = scmp.eq.s32.totalorder %s17, 0
    %p163 = por %p161, %p162
    %p164 = scmp.ne.s32.totalorder %s156, %s158
    %p165 = scmp.eq.s32.totalorder %s22, 1
    %p166 = por %p164, %p165
    %p167 = scmp.ne.s32.totalorder %s158, %s159
    %p168 = scmp.eq.s32.totalorder %s22, 0
    %p169 = por %p167, %p168
    %p170 = scmp.ne.s32.totalorder %s158, %s159
    %p171 = scmp.eq.s32.totalorder %s23, 1
    %p172 = por %p170, %p171
    %p174 = scmp.ne.s32.totalorder %s159, %s173
    %p175 = scmp.eq.s32.totalorder %s23, 0
    %p176 = por %p174, %p175
    %s178 = sadd.s32 %s177, 1
    %p181 = scmp.eq.s32.totalorder %s17, 1
    %p182 = scmp.ne.s32.totalorder %s177, %s179
    %p183 = scmp.eq.s32.totalorder %s17, 0
    %p184 = por %p182, %p183
    %p185 = scmp.ne.s32.totalorder %s177, %s179
    %p186 = scmp.eq.s32.totalorder %s22, 1
    %p187 = por %p185, %p186
    %p188 = scmp.ne.s32.totalorder %s179, %s180
    %p189 = scmp.eq.s32.totalorder %s22, 0
    %p190 = por %p188, %p189
    %p191 = scmp.ne.s32.totalorder %s179, %s180
    %p192 = scmp.eq.s32.totalorder %s23, 1
    %p193 = por %p191, %p192
    %p195 = scmp.ne.s32.totalorder %s180, %s194
    %p196 = scmp.eq.s32.totalorder %s23, 0
    %p197 = por %p195, %p196
    %s199 = sadd.s32 %s198, 1
    %p202 = scmp.eq.s32.totalorder %s17, 1
    %p203 = scmp.ne.s32.totalorder %s198, %s200
    %p204 = scmp.eq.s32.totalorder %s17, 0
    %p205 = por %p203, %p204
    %p206 = scmp.ne.s32.totalorder %s198, %s200
    %p207 = scmp.eq.s32.totalorder %s22, 1
    %p208 = por %p206, %p207
    %p209 = scmp.ne.s32.totalorder %s200, %s201
    %p210 = scmp.eq.s32.totalorder %s22, 0
    %p211 = por %p209, %p210
    %p212 = scmp.ne.s32.totalorder %s200, %s201
    %p213 = scmp.eq.s32.totalorder %s23, 1
    %p214 = por %p212, %p213
    %p216 = scmp.ne.s32.totalorder %s201, %s215
    %p217 = scmp.eq.s32.totalorder %s23, 0
    %p218 = por %p216, %p217
    %s220 = sadd.s32 %s219, 1
    %p223 = scmp.eq.s32.totalorder %s17, 1
    %p224 = scmp.ne.s32.totalorder %s219, %s221
    %p225 = scmp.eq.s32.totalorder %s17, 0
    %p226 = por %p224, %p225
    %p227 = scmp.ne.s32.totalorder %s219, %s221
    %p228 = scmp.eq.s32.totalorder %s22, 1
    %p229 = por %p227, %p228
    %p230 = scmp.ne.s32.totalorder %s221, %s222
    %p231 = scmp.eq.s32.totalorder %s22, 0
    %p232 = por %p230, %p231
    %p233 = scmp.ne.s32.totalorder %s221, %s222
    %p234 = scmp.eq.s32.totalorder %s23, 1
    %p235 = por %p233, %p234
    %p237 = scmp.ne.s32.totalorder %s222, %s236
    %p238 = scmp.eq.s32.totalorder %s23, 0
    %p239 = por %p237, %p238
    %s241 = sadd.s32 %s240, 1
    %p244 = scmp.eq.s32.totalorder %s17, 1
    %p245 = scmp.ne.s32.totalorder %s240, %s242
    %p246 = scmp.eq.s32.totalorder %s17, 0
    %p247 = por %p245, %p246
    %p248 = scmp.ne.s32.totalorder %s240, %s242
    %p249 = scmp.eq.s32.totalorder %s22, 1
    %p250 = por %p248, %p249
    %p251 = scmp.ne.s32.totalorder %s242, %s243
    %p252 = scmp.eq.s32.totalorder %s22, 0
    %p253 = por %p251, %p252
    %p254 = scmp.ne.s32.totalorder %s242, %s243
    %p255 = scmp.eq.s32.totalorder %s23, 1
    %p256 = por %p254, %p255
    %p258 = scmp.ne.s32.totalorder %s243, %s257
    %p259 = scmp.eq.s32.totalorder %s23, 0
    %p260 = por %p258, %p259
    %s261 = ssub.s32 %s17, %s24
    %p262 = scmp.eq.s32.totalorder %s261, 0
    %s264 = sadd.s32 %s263, 1
    %s265 = scalar_select %p262, %s263, %s264
    %p268 = pneg %p262
    %p269 = scmp.eq.s32.totalorder %s17, 1
    %p270 = por %p268, %p269
    %p271 = scmp.ne.s32.totalorder %s263, %s266
    %p272 = scmp.eq.s32.totalorder %s17, 0
    %p273 = por %p271, %p272
    %p274 = scmp.ne.s32.totalorder %s263, %s266
    %p275 = scmp.eq.s32.totalorder %s22, 1
    %p276 = por %p274, %p275
    %p277 = scmp.ne.s32.totalorder %s266, %s267
    %p278 = scmp.eq.s32.totalorder %s22, 0
    %p279 = por %p277, %p278
    %p280 = scmp.ne.s32.totalorder %s266, %s267
    %p281 = scmp.eq.s32.totalorder %s23, 1
    %p282 = por %p280, %p281
    %p284 = scmp.ne.s32.totalorder %s267, %s283
    %p285 = scmp.eq.s32.totalorder %s23, 0
    %p286 = por %p284, %p285
    %p287 = scmp.le.s32.totalorder 1, %s17
    %p288 = scmp.lt.s32.totalorder %s17, 3
    %p289 = pnand %p287, %p288
    %p290 = pneg %p289
    // Predicated region
    $region9: #{bottleneck_block.1} parent=5 // pred_check
      _
    $region10: #{bottleneck_block.1} parent=5 // pred_check_branch
      %292 = sbr.rel (%p289) target = $region12
    $region11: #{bottleneck_block.1} parent=5 // pred_region
      %s293 = ssub.s32 %s17, 1
      // Predicated region
      $region13: #{bottleneck_block.1} parent=11 // pred_check
        %p294 = pneg %p64
      $region14: #{bottleneck_block.1} parent=11 // pred_check_branch
        %296 = sbr.rel (%p294) target = $region16
      $region15: #{bottleneck_block.1} parent=11 // pred_region
        _
      $region16: #{bottleneck_block.1} parent=11 // pred_fallthru
        _
      // Predicated region
      $region17: #{bottleneck_block.1} parent=11 // pred_check
        %p297 = pneg %p85
      $region18: #{bottleneck_block.1} parent=11 // pred_check_branch
        %299 = sbr.rel (%p297) target = $region20
      $region19: #{bottleneck_block.1} parent=11 // pred_region
        _
      $region20: #{bottleneck_block.1} parent=11 // pred_fallthru
        _
      // Predicated region
      $region21: #{bottleneck_block.1} parent=11 // pred_check
        %p300 = pneg %p106
      $region22: #{bottleneck_block.1} parent=11 // pred_check_branch
        %302 = sbr.rel (%p300) target = $region24
      $region23: #{bottleneck_block.1} parent=11 // pred_region
        _
      $region24: #{bottleneck_block.1} parent=11 // pred_fallthru
        _
      // Predicated region
      $region25: #{bottleneck_block.1} parent=11 // pred_check
        %p303 = pneg %p127
      $region26: #{bottleneck_block.1} parent=11 // pred_check_branch
        %305 = sbr.rel (%p303) target = $region28
      $region27: #{bottleneck_block.1} parent=11 // pred_region
        _
      $region28: #{bottleneck_block.1} parent=11 // pred_fallthru
        _
      // Predicated region
      $region29: #{bottleneck_block.1} parent=11 // pred_check
        %p306 = pneg %p148
      $region30: #{bottleneck_block.1} parent=11 // pred_check_branch
        %308 = sbr.rel (%p306) target = $region32
      $region31: #{bottleneck_block.1} parent=11 // pred_region
        _
      $region32: #{bottleneck_block.1} parent=11 // pred_fallthru
        _
      // Predicated region
      $region33: #{bottleneck_block.1} parent=11 // pred_check
        %p309 = pneg %p169
      $region34: #{bottleneck_block.1} parent=11 // pred_check_branch
        %311 = sbr.rel (%p309) target = $region36
      $region35: #{bottleneck_block.1} parent=11 // pred_region
        _
      $region36: #{bottleneck_block.1} parent=11 // pred_fallthru
        _
      // Predicated region
      $region37: #{bottleneck_block.1} parent=11 // pred_check
        %p312 = pneg %p190
      $region38: #{bottleneck_block.1} parent=11 // pred_check_branch
        %314 = sbr.rel (%p312) target = $region40
      $region39: #{bottleneck_block.1} parent=11 // pred_region
        _
      $region40: #{bottleneck_block.1} parent=11 // pred_fallthru
        _
      // Predicated region
      $region41: #{bottleneck_block.1} parent=11 // pred_check
        %p315 = pneg %p211
      $region42: #{bottleneck_block.1} parent=11 // pred_check_branch
        %317 = sbr.rel (%p315) target = $region44
      $region43: #{bottleneck_block.1} parent=11 // pred_region
        _
      $region44: #{bottleneck_block.1} parent=11 // pred_fallthru
        _
      // Predicated region
      $region45: #{bottleneck_block.1} parent=11 // pred_check
        %p318 = pneg %p232
      $region46: #{bottleneck_block.1} parent=11 // pred_check_branch
        %320 = sbr.rel (%p318) target = $region48
      $region47: #{bottleneck_block.1} parent=11 // pred_region
        _
      $region48: #{bottleneck_block.1} parent=11 // pred_fallthru
        _
      // Predicated region
      $region49: #{bottleneck_block.1} parent=11 // pred_check
        %p321 = pneg %p253
      $region50: #{bottleneck_block.1} parent=11 // pred_check_branch
        %323 = sbr.rel (%p321) target = $region52
      $region51: #{bottleneck_block.1} parent=11 // pred_region
        _
      $region52: #{bottleneck_block.1} parent=11 // pred_fallthru
        _
    $region12: #{bottleneck_block.1} parent=5 // pred_fallthru
      _
    %p324 = scmp.lt.s32.totalorder %s17, 2
    // Predicated region
    $region53: #{bottleneck_block.1} parent=5 // pred_check
      %p325 = pneg %p324
    $region54: #{bottleneck_block.1} parent=5 // pred_check_branch
      %327 = sbr.rel (%p325) target = $region56
    $region55: #{bottleneck_block.1} parent=5 // pred_region
      // Predicated region
      $region57: #{bottleneck_block.1} parent=55 // pred_check
        %p328 = pneg %p37
      $region58: #{bottleneck_block.1} parent=55 // pred_check_branch
        %330 = sbr.rel (%p328) target = $region60
      $region59: #{bottleneck_block.1} parent=55 // pred_region
        %s331 = smul.u32 2, %s17
        %p332 = scmp.lt.s32.totalorder %s331, 3
        %s333 = scalar_select %p332, %s331, 3
        %s334 = smul.addr %s333, 4
        %s335 = scalar_lea.vmem %s0, %s334
        %s336 = smul.u32 2, %s17
      $region60: #{bottleneck_block.1} parent=55 // pred_fallthru
        _
    $region56: #{bottleneck_block.1} parent=5 // pred_fallthru
      _
    %p337 = scmp.le.s32.totalorder 1, %s17
    %p338 = scmp.lt.s32.totalorder %s17, 3
    %p339 = pnand %p337, %p338
    %p340 = pneg %p339
    // Predicated region
    $region61: #{bottleneck_block.1} parent=5 // pred_check
      _
    $region62: #{bottleneck_block.1} parent=5 // pred_check_branch
      %342 = sbr.rel (%p339) target = $region64
    $region63: #{bottleneck_block.1} parent=5 // pred_region
      %s343 = ssub.s32 %s17, 1
      %s344 = smul.u32 2, %s22
      %p345 = scmp.lt.s32.totalorder %s344, 3
      %s346 = scalar_select %p345, %s344, 3
      %s347 = smul.addr %s346, 4
      %s348 = scalar_lea.vmem %s0, %s347
      %p349 = pneg %p43
      %p350 = pneg %p40
      %p351 = pneg %p64
      %p352 = pneg %p61
      %p353 = pneg %p85
      %p354 = pneg %p82
      %p355 = pneg %p106
      %p356 = pneg %p103
      %p357 = pneg %p127
      %p358 = pneg %p124
      %p359 = pneg %p148
      %p360 = pneg %p145
      %p361 = pneg %p169
      %p362 = pneg %p166
      %p363 = pneg %p190
      %p364 = pneg %p187
      %p365 = pneg %p211
      %p366 = pneg %p208
      %p367 = pneg %p232
      %p368 = pneg %p229
      %p369 = pneg %p253
      %p370 = pneg %p250
      %p371 = pneg %p279
      %p372 = pneg %p276
      %s373 = smul.u32 2, %s22
      %p374 = scmp.lt.s32.totalorder %s373, 3
      %s375 = scalar_select %p374, %s373, 3
      %s376 = smul.addr %s375, 4
      %s377 = scalar_lea.vmem %s11, %s376
      %s378 = smul.u32 2, %s22
      %p379 = scmp.lt.s32.totalorder %s378, 3
      %s380 = scalar_select %p379, %s378, 3
      %s381 = smul.addr %s380, 4
      %s382 = scalar_lea.vmem %s0, %s381
      %s383 = smul.u32 2, %s22
      %s384 = smul.u32 2, %s22
      %p385 = scmp.lt.s32.totalorder %s384, 3
      %s386 = scalar_select %p385, %s384, 3
      %s387 = smul.addr %s386, 4
      %s388 = scalar_lea.vmem %s11, %s387
      %s389 = smul.u32 2, %s22
      %v390 = vld [vmem:[%s382] sm:$0xf]
      %v391 = vld [vmem:[%s382 + $0x4] sm:$0xf]
      %v392 = vld [vmem:[%s1] sm:$0xf]
      %v393 = vld [vmem:[%s1 + $0x4] sm:$0xf]
      %v394 = vld [vmem:[%s1 + $0x8] sm:$0xf]
      %v395 = vld [vmem:[%s1 + $0xc] sm:$0xf]
      %v396 = vld [vmem:[%s1 + $0x10] sm:$0xf]
      %v397 = vld [vmem:[%s1 + $0x14] sm:$0xf]
      %v398 = vld [vmem:[%s1 + $0x18] sm:$0xf]
      %v399 = vld [vmem:[%s1 + $0x1c] sm:$0xf]
      %v400 = vld [vmem:[%s1 + $0x20] sm:$0xf]
      %v401 = vld [vmem:[%s1 + $0x24] sm:$0xf]
      %v402 = vld [vmem:[%s1 + $0x28] sm:$0xf]
      %v403 = vld [vmem:[%s1 + $0x2c] sm:$0xf]
      %v404 = vld [vmem:[%s1 + $0x30] sm:$0xf]
      %v405 = vld [vmem:[%s1 + $0x34] sm:$0xf]
      %v406 = vld [vmem:[%s1 + $0x38] sm:$0xf]
      %v407 = vld [vmem:[%s1 + $0x3c] sm:$0xf]
      %v408 = vld [vmem:[%s6] sm:$0x1]
      %v410 = vperm.slane %v408, 0
      %v414 = vunpack.c.l.b16 %v390
      %v415 = vunpack.c.l.b16 %v391
      %v416 = vpack.c.b16 %v415, %v414
      %v434 = vunpack.c.l.b16 %v392
      %v435 = vunpack.c.l.b16 %v393
      %v436 = vunpack.c.l.b16 %v394
      %v437 = vunpack.c.l.b16 %v395
      %v438 = vunpack.c.l.b16 %v396
      %v439 = vunpack.c.l.b16 %v397
      %v440 = vunpack.c.l.b16 %v398
      %v441 = vunpack.c.l.b16 %v399
      %v442 = vunpack.c.l.b16 %v400
      %v443 = vunpack.c.l.b16 %v401
      %v444 = vunpack.c.l.b16 %v402
      %v445 = vunpack.c.l.b16 %v403
      %v446 = vunpack.c.l.b16 %v404
      %v447 = vunpack.c.l.b16 %v405
      %v448 = vunpack.c.l.b16 %v406
      %v449 = vunpack.c.l.b16 %v407
      %v450 = vpack.c.b16 %v435, %v434
      %v451 = vpack.c.b16 %v437, %v436
      %v452 = vpack.c.b16 %v439, %v438
      %v453 = vpack.c.b16 %v441, %v440
      %v454 = vpack.c.b16 %v443, %v442
      %v455 = vpack.c.b16 %v445, %v444
      %v456 = vpack.c.b16 %v447, %v446
      %v457 = vpack.c.b16 %v449, %v448
      %466 = vmatpush.bf16.msra.mxu0 %v457
      %467 = vmatpush.bf16.msra.mxu0 %v456
      %468 = vmatpush.bf16.msra.mxu0 %v455
      %469 = vmatpush.bf16.msra.mxu0 %v454
      %470 = vmatpush.bf16.msra.mxu0 %v453
      %471 = vmatpush.bf16.msra.mxu0 %v452
      %472 = vmatpush.bf16.msra.mxu0 %v451
      %473 = vmatpush.bf16.msra.mxu0 %v450
      %474 = vmatmul.bf16.gmra.mxu0 %v416
      %v475 = vpop.f32.mrf.mxu0
      %v476 = vadd.f32 %v410, %v475
      %v477 = vpop.f32.mrf.mxu0
      %v478 = vadd.f32 %v410, %v477
      %479 = vdwg.mxu0
      %v480 = vmax.f32 %v476, 0.0
      %v481 = vmax.f32 %v478, 0.0
      %v482 = vrot.slane %v480, 7
      %v483 = vrot.slane %v481, 7
      %v484 = vlaneseq
      %v485 = vshrl.u32 %v484, 7
      %vm486 = vcmp.lt.s32.totalorder %v485, 1
      %v487 = vsel %vm486, %v482, %v483
      %v488 = vsel %vm486, %v483, %v482
      %v489 = vld [vmem:[%s9] sm:$0xff]
      %v490 = vld [vmem:[%s9 + $0x8] sm:$0xff]
      %492 = vset.pattern.permute.xlu0 0
      %493 = vperm.xlu0 %492, %v489
      %v494 = vpop.permute.xlu0 %493
      %497 = vset.pattern.permute.xlu0 0
      %498 = vperm.xlu0 %497, %v490
      %v499 = vpop.permute.xlu0 %498
      %v501 = vmul.f32 %v488, %v494
      %v502 = vmul.f32 %v487, %v499
      %v503 = vpack.c.bf16 %v502, %v501
      %v504 = vrot.slane %v480, 1
      %v505 = vrot.slane %v481, 1
      %vm506 = vcmp.lt.s32.totalorder %v485, 7
      %v507 = vsel %vm506, %v504, %v505
      %v508 = vsel %vm506, %v505, %v504
      %v509 = vld [vmem:[%s10] sm:$0xff]
      %v510 = vld [vmem:[%s10 + $0x8] sm:$0xff]
      %512 = vset.pattern.permute.xlu0 0
      %513 = vperm.xlu0 %512, %v509
      %v514 = vpop.permute.xlu0 %513
      %517 = vset.pattern.permute.xlu0 0
      %518 = vperm.xlu0 %517, %v510
      %v519 = vpop.permute.xlu0 %518
      %v521 = vmul.f32 %v507, %v514
      %v522 = vmul.f32 %v508, %v519
      %v523 = vpack.c.bf16 %v522, %v521
      %v524 = vld [vmem:[%s2] sm:$0xf]
      %v525 = vld [vmem:[%s2 + $0x4] sm:$0xf]
      %v526 = vld [vmem:[%s2 + $0x8] sm:$0xf]
      %v527 = vld [vmem:[%s2 + $0xc] sm:$0xf]
      %v528 = vld [vmem:[%s2 + $0x10] sm:$0xf]
      %v529 = vld [vmem:[%s2 + $0x14] sm:$0xf]
      %v530 = vld [vmem:[%s2 + $0x18] sm:$0xf]
      %v531 = vld [vmem:[%s2 + $0x1c] sm:$0xf]
      %v532 = vld [vmem:[%s2 + $0x20] sm:$0xf]
      %v533 = vld [vmem:[%s2 + $0x24] sm:$0xf]
      %v534 = vld [vmem:[%s2 + $0x28] sm:$0xf]
      %v535 = vld [vmem:[%s2 + $0x2c] sm:$0xf]
      %v536 = vld [vmem:[%s2 + $0x30] sm:$0xf]
      %v537 = vld [vmem:[%s2 + $0x34] sm:$0xf]
      %v538 = vld [vmem:[%s2 + $0x38] sm:$0xf]
      %v539 = vld [vmem:[%s2 + $0x3c] sm:$0xf]
      %v540 = vpack.c.bf16 %v481, %v480
      %v541 = vld [vmem:[%s3] sm:$0xf]
      %v542 = vld [vmem:[%s3 + $0x4] sm:$0xf]
      %v543 = vld [vmem:[%s3 + $0x8] sm:$0xf]
      %v544 = vld [vmem:[%s3 + $0xc] sm:$0xf]
      %v545 = vld [vmem:[%s3 + $0x10] sm:$0xf]
      %v546 = vld [vmem:[%s3 + $0x14] sm:$0xf]
      %v547 = vld [vmem:[%s3 + $0x18] sm:$0xf]
      %v548 = vld [vmem:[%s3 + $0x1c] sm:$0xf]
      %v549 = vld [vmem:[%s3 + $0x20] sm:$0xf]
      %v550 = vld [vmem:[%s3 + $0x24] sm:$0xf]
      %v551 = vld [vmem:[%s3 + $0x28] sm:$0xf]
      %v552 = vld [vmem:[%s3 + $0x2c] sm:$0xf]
      %v553 = vld [vmem:[%s3 + $0x30] sm:$0xf]
      %v554 = vld [vmem:[%s3 + $0x34] sm:$0xf]
      %v555 = vld [vmem:[%s3 + $0x38] sm:$0xf]
      %v556 = vld [vmem:[%s3 + $0x3c] sm:$0xf]
      %v573 = vunpack.c.l.b16 %v541
      %v574 = vunpack.c.l.b16 %v542
      %v575 = vunpack.c.l.b16 %v543
      %v576 = vunpack.c.l.b16 %v544
      %v577 = vunpack.c.l.b16 %v545
      %v578 = vunpack.c.l.b16 %v546
      %v579 = vunpack.c.l.b16 %v547
      %v580 = vunpack.c.l.b16 %v548
      %v581 = vunpack.c.l.b16 %v549
      %v582 = vunpack.c.l.b16 %v550
      %v583 = vunpack.c.l.b16 %v551
      %v584 = vunpack.c.l.b16 %v552
      %v585 = vunpack.c.l.b16 %v553
      %v586 = vunpack.c.l.b16 %v554
      %v587 = vunpack.c.l.b16 %v555
      %v588 = vunpack.c.l.b16 %v556
      %v589 = vpack.c.b16 %v574, %v573
      %v590 = vpack.c.b16 %v576, %v575
      %v591 = vpack.c.b16 %v578, %v577
      %v592 = vpack.c.b16 %v580, %v579
      %v593 = vpack.c.b16 %v582, %v581
      %v594 = vpack.c.b16 %v584, %v583
      %v595 = vpack.c.b16 %v586, %v585
      %v596 = vpack.c.b16 %v588, %v587
      %605 = vmatpush.bf16.msra.mxu0 %v596
      %606 = vmatpush.bf16.msra.mxu0 %v595
      %607 = vmatpush.bf16.msra.mxu0 %v594
      %608 = vmatpush.bf16.msra.mxu0 %v593
      %609 = vmatpush.bf16.msra.mxu0 %v592
      %610 = vmatpush.bf16.msra.mxu0 %v591
      %611 = vmatpush.bf16.msra.mxu0 %v590
      %612 = vmatpush.bf16.msra.mxu0 %v589
      %613 = vmatmul.bf16.gmra.mxu0 %v540
      %v614 = vpop.f32.mrf.mxu0
      %v615 = vadd.f32 0.0, %v614
      %v616 = vpop.f32.mrf.mxu0
      %v617 = vadd.f32 0.0, %v616
      %618 = vdwg.mxu0
      %v635 = vunpack.c.l.b16 %v524
      %v636 = vunpack.c.l.b16 %v525
      %v637 = vunpack.c.l.b16 %v526
      %v638 = vunpack.c.l.b16 %v527
      %v639 = vunpack.c.l.b16 %v528
      %v640 = vunpack.c.l.b16 %v529
      %v641 = vunpack.c.l.b16 %v530
      %v642 = vunpack.c.l.b16 %v531
      %v643 = vunpack.c.l.b16 %v532
      %v644 = vunpack.c.l.b16 %v533
      %v645 = vunpack.c.l.b16 %v534
      %v646 = vunpack.c.l.b16 %v535
      %v647 = vunpack.c.l.b16 %v536
      %v648 = vunpack.c.l.b16 %v537
      %v649 = vunpack.c.l.b16 %v538
      %v650 = vunpack.c.l.b16 %v539
      %v651 = vpack.c.b16 %v636, %v635
      %v652 = vpack.c.b16 %v638, %v637
      %v653 = vpack.c.b16 %v640, %v639
      %v654 = vpack.c.b16 %v642, %v641
      %v655 = vpack.c.b16 %v644, %v643
      %v656 = vpack.c.b16 %v646, %v645
      %v657 = vpack.c.b16 %v648, %v647
      %v658 = vpack.c.b16 %v650, %v649
      %667 = vmatpush.bf16.msra.mxu0 %v658
      %668 = vmatpush.bf16.msra.mxu0 %v657
      %669 = vmatpush.bf16.msra.mxu0 %v656
      %670 = vmatpush.bf16.msra.mxu0 %v655
      %671 = vmatpush.bf16.msra.mxu0 %v654
      %672 = vmatpush.bf16.msra.mxu0 %v653
      %673 = vmatpush.bf16.msra.mxu0 %v652
      %674 = vmatpush.bf16.msra.mxu0 %v651
      %675 = vmatmul.bf16.gmra.mxu0 %v503
      %v676 = vpop.f32.mrf.mxu0
      %v677 = vadd.f32 %v615, %v676
      %v678 = vpop.f32.mrf.mxu0
      %v679 = vadd.f32 %v617, %v678
      %680 = vdwg.mxu0
      %v681 = vld [vmem:[%s4] sm:$0xf]
      %v682 = vld [vmem:[%s4 + $0x4] sm:$0xf]
      %v683 = vld [vmem:[%s4 + $0x8] sm:$0xf]
      %v684 = vld [vmem:[%s4 + $0xc] sm:$0xf]
      %v685 = vld [vmem:[%s4 + $0x10] sm:$0xf]
      %v686 = vld [vmem:[%s4 + $0x14] sm:$0xf]
      %v687 = vld [vmem:[%s4 + $0x18] sm:$0xf]
      %v688 = vld [vmem:[%s4 + $0x1c] sm:$0xf]
      %v689 = vld [vmem:[%s4 + $0x20] sm:$0xf]
      %v690 = vld [vmem:[%s4 + $0x24] sm:$0xf]
      %v691 = vld [vmem:[%s4 + $0x28] sm:$0xf]
      %v692 = vld [vmem:[%s4 + $0x2c] sm:$0xf]
      %v693 = vld [vmem:[%s4 + $0x30] sm:$0xf]
      %v694 = vld [vmem:[%s4 + $0x34] sm:$0xf]
      %v695 = vld [vmem:[%s4 + $0x38] sm:$0xf]
      %v696 = vld [vmem:[%s4 + $0x3c] sm:$0xf]
      %v713 = vunpack.c.l.b16 %v681
      %v714 = vunpack.c.l.b16 %v682
      %v715 = vunpack.c.l.b16 %v683
      %v716 = vunpack.c.l.b16 %v684
      %v717 = vunpack.c.l.b16 %v685
      %v718 = vunpack.c.l.b16 %v686
      %v719 = vunpack.c.l.b16 %v687
      %v720 = vunpack.c.l.b16 %v688
      %v721 = vunpack.c.l.b16 %v689
      %v722 = vunpack.c.l.b16 %v690
      %v723 = vunpack.c.l.b16 %v691
      %v724 = vunpack.c.l.b16 %v692
      %v725 = vunpack.c.l.b16 %v693
      %v726 = vunpack.c.l.b16 %v694
      %v727 = vunpack.c.l.b16 %v695
      %v728 = vunpack.c.l.b16 %v696
      %v729 = vpack.c.b16 %v714, %v713
      %v730 = vpack.c.b16 %v716, %v715
      %v731 = vpack.c.b16 %v718, %v717
      %v732 = vpack.c.b16 %v720, %v719
      %v733 = vpack.c.b16 %v722, %v721
      %v734 = vpack.c.b16 %v724, %v723
      %v735 = vpack.c.b16 %v726, %v725
      %v736 = vpack.c.b16 %v728, %v727
      %745 = vmatpush.bf16.msra.mxu0 %v736
      %746 = vmatpush.bf16.msra.mxu0 %v735
      %747 = vmatpush.bf16.msra.mxu0 %v734
      %748 = vmatpush.bf16.msra.mxu0 %v733
      %749 = vmatpush.bf16.msra.mxu0 %v732
      %750 = vmatpush.bf16.msra.mxu0 %v731
      %751 = vmatpush.bf16.msra.mxu0 %v730
      %752 = vmatpush.bf16.msra.mxu0 %v729
      %753 = vmatmul.bf16.gmra.mxu0 %v523
      %v754 = vpop.f32.mrf.mxu0
      %v755 = vadd.f32 0.0, %v754
      %v756 = vpop.f32.mrf.mxu0
      %v757 = vadd.f32 0.0, %v756
      %758 = vdwg.mxu0
      %v759 = vadd.f32 %v677, %v755
      %v760 = vadd.f32 %v679, %v757
      %v761 = vld [vmem:[%s7] sm:$0x1]
      %v763 = vperm.slane %v761, 0
      %v765 = vadd.f32 %v759, %v763
      %v766 = vadd.f32 %v760, %v763
      %v767 = vmax.f32 %v765, 0.0
      %v768 = vmax.f32 %v766, 0.0
      %v769 = vpack.c.bf16 %v768, %v767
      %v770 = vld [vmem:[%s5] sm:$0xf]
      %v771 = vld [vmem:[%s5 + $0x4] sm:$0xf]
      %v772 = vld [vmem:[%s5 + $0x8] sm:$0xf]
      %v773 = vld [vmem:[%s5 + $0xc] sm:$0xf]
      %v774 = vld [vmem:[%s5 + $0x10] sm:$0xf]
      %v775 = vld [vmem:[%s5 + $0x14] sm:$0xf]
      %v776 = vld [vmem:[%s5 + $0x18] sm:$0xf]
      %v777 = vld [vmem:[%s5 + $0x1c] sm:$0xf]
      %v778 = vld [vmem:[%s5 + $0x20] sm:$0xf]
      %v779 = vld [vmem:[%s5 + $0x24] sm:$0xf]
      %v780 = vld [vmem:[%s5 + $0x28] sm:$0xf]
      %v781 = vld [vmem:[%s5 + $0x2c] sm:$0xf]
      %v782 = vld [vmem:[%s5 + $0x30] sm:$0xf]
      %v783 = vld [vmem:[%s5 + $0x34] sm:$0xf]
      %v784 = vld [vmem:[%s5 + $0x38] sm:$0xf]
      %v785 = vld [vmem:[%s5 + $0x3c] sm:$0xf]
      %v786 = vld [vmem:[%s8] sm:$0x1]
      %v788 = vperm.slane %v786, 0
      %v806 = vunpack.c.l.b16 %v770
      %v807 = vunpack.c.l.b16 %v771
      %v808 = vunpack.c.l.b16 %v772
      %v809 = vunpack.c.l.b16 %v773
      %v810 = vunpack.c.l.b16 %v774
      %v811 = vunpack.c.l.b16 %v775
      %v812 = vunpack.c.l.b16 %v776
      %v813 = vunpack.c.l.b16 %v777
      %v814 = vunpack.c.l.b16 %v778
      %v815 = vunpack.c.l.b16 %v779
      %v816 = vunpack.c.l.b16 %v780
      %v817 = vunpack.c.l.b16 %v781
      %v818 = vunpack.c.l.b16 %v782
      %v819 = vunpack.c.l.b16 %v783
      %v820 = vunpack.c.l.b16 %v784
      %v821 = vunpack.c.l.b16 %v785
      %v822 = vpack.c.b16 %v807, %v806
      %v823 = vpack.c.b16 %v809, %v808
      %v824 = vpack.c.b16 %v811, %v810
      %v825 = vpack.c.b16 %v813, %v812
      %v826 = vpack.c.b16 %v815, %v814
      %v827 = vpack.c.b16 %v817, %v816
      %v828 = vpack.c.b16 %v819, %v818
      %v829 = vpack.c.b16 %v821, %v820
      %838 = vmatpush.bf16.msra.mxu0 %v829
      %839 = vmatpush.bf16.msra.mxu0 %v828
      %840 = vmatpush.bf16.msra.mxu0 %v827
      %841 = vmatpush.bf16.msra.mxu0 %v826
      %842 = vmatpush.bf16.msra.mxu0 %v825
      %843 = vmatpush.bf16.msra.mxu0 %v824
      %844 = vmatpush.bf16.msra.mxu0 %v823
      %845 = vmatpush.bf16.msra.mxu0 %v822
      %846 = vmatmul.bf16.gmra.mxu0 %v769
      %v847 = vpop.f32.mrf.mxu0
      %v848 = vadd.f32 %v788, %v847
      %v849 = vpop.f32.mrf.mxu0
      %v850 = vadd.f32 %v788, %v849
      %851 = vdwg.mxu0
      %v852 = vunpack.c.l.bf16 %v390
      %v853 = vunpack.c.l.bf16 %v391
      %v854 = vadd.f32 %v848, %v852
      %v855 = vadd.f32 %v850, %v853
      %v856 = vmax.f32 %v854, 0.0
      %v857 = vmax.f32 %v855, 0.0
      %v858 = vpack.c.bf16 %v856, %v856
      %v859 = vpack.c.bf16 %v857, %v857
      %860 = vst [vmem:[%s388] sm:$0xf] %v858
      %861 = vst [vmem:[%s388 + $0x4] sm:$0xf] %v859
      %s862 = smul.u32 2, %s22
      %p863 = scmp.lt.s32.totalorder %s862, 3
      %s864 = scalar_select %p863, %s862, 3
      %s865 = smul.addr %s864, 4
      %s866 = scalar_lea.vmem %s11, %s865
      // Predicated region
      $region65: #{bottleneck_block.1} parent=63 // pred_check
        %p867 = pneg %p276
      $region66: #{bottleneck_block.1} parent=63 // pred_check_branch
        %869 = sbr.rel (%p867) target = $region68
      $region67: #{bottleneck_block.1} parent=63 // pred_region
        %s870 = smul.u32 2, %s22
      $region68: #{bottleneck_block.1} parent=63 // pred_fallthru
        _
    $region64: #{bottleneck_block.1} parent=5 // pred_fallthru
      _
    %p871 = scmp.le.s32.totalorder 2, %s17
    // Predicated region
    $region69: #{bottleneck_block.1} parent=5 // pred_check
      %p872 = pneg %p871
    $region70: #{bottleneck_block.1} parent=5 // pred_check_branch
      %874 = sbr.rel (%p872) target = $region72
    $region71: #{bottleneck_block.1} parent=5 // pred_region
      %s875 = ssub.s32 %s17, 2
      // Predicated region
      $region73: #{bottleneck_block.1} parent=71 // pred_check
        %p876 = pneg %p282
      $region74: #{bottleneck_block.1} parent=71 // pred_check_branch
        %878 = sbr.rel (%p876) target = $region76
      $region75: #{bottleneck_block.1} parent=71 // pred_region
        %s879 = smul.u32 2, %s23
        %p880 = scmp.lt.s32.totalorder %s879, 3
        %s881 = scalar_select %p880, %s879, 3
        %s882 = smul.addr %s881, 4
        %s883 = scalar_lea.vmem %s11, %s882
      $region76: #{bottleneck_block.1} parent=71 // pred_fallthru
        _
    $region72: #{bottleneck_block.1} parent=5 // pred_fallthru
      _
  $region6: #{bottleneck_block.1} parent=0 // loop_footer
    %s21 = sadd.s32 1, %s17
  $region7: #{bottleneck_block.1} parent=0 // loop_footer_branch
    %16 = sbr.rel target = $region3
  $region8: #{bottleneck_block.1} parent=0 // loop_exit
    _

</llo_original>
